<compile_context>
chip_gen: v7x
topology: tpu7x:2x2x1
jax: 0.10.0
libtpu: 0.0.40
codegen_flags: <defaults>
</compile_context>

<pallas_src>
import jax
import jax.numpy as jnp
from jax.experimental import pallas as pl
from jax.experimental.pallas import tpu as pltpu


def initpred_kernel(x_ref, w_ref, b_ref, o_ref):
    # x_ref: (tile_rows, packed_dim)      packed_dim = pack * latent_dim (lane-dense)
    # w_ref: (packed_dim, pack*out_dim)   block-diagonal weight (built in wrapper)
    # b_ref: (1, pack*out_dim)            bias tiled per packed sample (f32)
    # o_ref: (tile_rows, pack*out_dim)
    z = jnp.dot(x_ref[...], w_ref[...], preferred_element_type=jnp.float32)
    z = z + b_ref[...]                      # f32 math throughout
    o_ref[...] = jnp.tanh(z).astype(o_ref.dtype)


def _round_up(a, m):
    return ((a + m - 1) // m) * m


def initpred_forward(x, w, b, *, tile_rows_target=4096):
    """out = tanh(x @ w.T + b).

    x: (B, latent_dim), w: (out_dim, latent_dim), b: (out_dim,).
    """
    B, latent_dim = x.shape
    out_dim = w.shape[0]

    # Pack several samples per 128-lane row when the feature dim allows it.
    if latent_dim <= 128 and 128 % latent_dim == 0:
        pack = 128 // latent_dim
    else:
        pack = 1
    packed_dim = pack * latent_dim
    packed_out = pack * out_dim

    # --- tiling: big streaming blocks, grid >= 2 for non-tiny inputs ---
    r = -(-B // pack)                        # packed rows needed
    if r <= 16:
        tile_rows = _round_up(r, 8)          # single small block
    else:
        tile_rows = min(tile_rows_target, _round_up(-(-r // 2), 8))
    r_pad = _round_up(r, tile_rows)
    b_pad = r_pad * pack
    grid = r_pad // tile_rows

    # Pad batch (cheap, sliced off afterwards) and take the free packed view.
    x_pad = jnp.pad(x, ((0, b_pad - B), (0, 0))) if b_pad != B else x
    x_packed = x_pad.reshape(r_pad, packed_dim)

    # Block-diagonal weight (packed_dim, packed_out), built once outside the kernel.
    wt = jnp.asarray(w).T                    # (latent_dim, out_dim)
    if pack == 1:
        w_bd = wt
    else:
        w_bd = jnp.kron(jnp.eye(pack, dtype=wt.dtype), wt)
    w_bd = w_bd.astype(x.dtype)
    b_pk = jnp.tile(jnp.reshape(jnp.asarray(b), (1, out_dim)), (1, pack)).astype(jnp.float32)

    cost = pl.CostEstimate(
        flops=2 * B * latent_dim * out_dim,
        transcendentals=B * out_dim,
        bytes_accessed=4 * (B * latent_dim + B * out_dim + latent_dim * out_dim + out_dim),
    )

    out_packed = pl.pallas_call(
        initpred_kernel,
        out_shape=jax.ShapeDtypeStruct((r_pad, packed_out), x.dtype),
        grid_spec=pltpu.PrefetchScalarGridSpec(
            num_scalar_prefetch=0,
            grid=(grid,),
            in_specs=[
                pl.BlockSpec((tile_rows, packed_dim), lambda i: (i, 0)),
                pl.BlockSpec((packed_dim, packed_out), lambda i: (0, 0)),
                pl.BlockSpec((1, packed_out), lambda i: (0, 0)),
            ],
            out_specs=pl.BlockSpec((tile_rows, packed_out), lambda i: (i, 0)),
        ),
        compiler_params=pltpu.CompilerParams(
            dimension_semantics=("parallel",),
        ),
        cost_estimate=cost,
    )(x_packed, w_bd, b_pk)

    # Unpack back to (B, out_dim); (r_pad, packed_out) -> (b_pad, out_dim) is a
    # contiguous row-major reshape, then drop pad rows.
    return out_packed.reshape(b_pad, out_dim)[:B]


if __name__ == "__main__":
    latent_dim = 32
    out_dim = 1

    key = jax.random.PRNGKey(0)
    kx, kw, kb, kx2 = jax.random.split(key, 4)

    # Deterministic parameter init (mimics PyTorch Linear default: U(-1/sqrt(in), 1/sqrt(in)))
    bound = 1.0 / (latent_dim ** 0.5)
    w = jax.random.uniform(kw, (out_dim, latent_dim), jnp.float32, -bound, bound)
    b = jax.random.uniform(kb, (out_dim,), jnp.float32, -bound, bound)

    fwd = jax.jit(lambda xx: initpred_forward(xx, w, b))

    # Small batch (single-block path).
    batch = 16
    x = jax.random.normal(kx, (batch, latent_dim), jnp.float32)
    out = fwd(x)
    jax.block_until_ready(out)
    ref = jnp.tanh(x @ w.T + b[None, :])
    assert out.shape == (batch, out_dim)
    assert jnp.allclose(out, ref, atol=1e-5, rtol=1e-5)

    # Batch that is not a multiple of the pack/tile (exercises padding + grid >= 2).
    batch2 = 100
    x2 = jax.random.normal(kx2, (batch2, latent_dim), jnp.float32)
    out2 = fwd(x2)
    jax.block_until_ready(out2)
    ref2 = jnp.tanh(x2 @ w.T + b[None, :])
    assert out2.shape == (batch2, out_dim)
    assert jnp.allclose(out2, ref2, atol=1e-5, rtol=1e-5)

    print("KERNEL_OK")
</pallas_src>

<mosaic_0001>
module attributes {stable_mosaic.version = 11 : i64} {
  func.func @initpred_kernel(%arg0: i32, %arg1: memref<8x128xf32, #tpu.memory_space<vmem>>, %arg2: memref<128x4xf32, #tpu.memory_space<vmem>>, %arg3: memref<1x4xf32, #tpu.memory_space<vmem>>, %arg4: memref<8x4xf32, #tpu.memory_space<vmem>>) attributes {dimension_semantics = [#tpu.dimension_semantics<parallel>], iteration_bounds = array<i64: 1>, scalar_prefetch = 0 : i64, scratch_operands = 0 : i64, tpu.core_type = #tpu.core_type<tc>, window_params = [{transform_indices = @transform_0, window_bounds = array<i64: 8, 128>}, {pipeline_mode = #tpu.pipeline_mode<synchronous>, transform_indices = @transform_1, window_bounds = array<i64: 128, 4>}, {pipeline_mode = #tpu.pipeline_mode<synchronous>, transform_indices = @transform_2, window_bounds = array<i64: 1, 4>}, {transform_indices = @transform_3, window_bounds = array<i64: 8, 4>}]} {
    %c0 = arith.constant 0 : index
    %c0_0 = arith.constant 0 : index
    %0 = vector.load %arg1[%c0, %c0_0] : memref<8x128xf32, #tpu.memory_space<vmem>>, vector<8x128xf32>
    %c0_1 = arith.constant 0 : index
    %c0_2 = arith.constant 0 : index
    %1 = vector.load %arg2[%c0_1, %c0_2] : memref<128x4xf32, #tpu.memory_space<vmem>>, vector<128x4xf32>
    %cst = arith.constant dense<0.000000e+00> : vector<8x4xf32>
    %2 = tpu.matmul %0, %1, %cst {dimension_numbers = #tpu.dot_dimension_numbers<[1], [0], [0], [1], [0, 0, 1, 1], [], []>} : vector<8x128xf32>, vector<128x4xf32>, vector<8x4xf32> -> vector<8x4xf32>
    %c0_3 = arith.constant 0 : index
    %c0_4 = arith.constant 0 : index
    %3 = vector.load %arg3[%c0_3, %c0_4] : memref<1x4xf32, #tpu.memory_space<vmem>>, vector<1x4xf32>
    %4 = vector.broadcast %3 : vector<1x4xf32> to vector<8x4xf32>
    %5 = arith.addf %2, %4 : vector<8x4xf32>
    %6 = math.tanh %5 : vector<8x4xf32>
    %c0_5 = arith.constant 0 : index
    %c0_6 = arith.constant 0 : index
    %7 = vector.load %arg4[%c0_5, %c0_6] : memref<8x4xf32, #tpu.memory_space<vmem>>, vector<8x4xf32>
    tpu.vector_store %arg4[%c0_5, %c0_6], %6 {strides = array<i32>} : memref<8x4xf32, #tpu.memory_space<vmem>>, vector<8x4xf32>,
    return
  }
  func.func @transform_0(%arg0: i32) -> (i32, i32) {
    %c0_i32 = arith.constant 0 : i32
    %c0_i32_0 = arith.constant 0 : i32
    return %arg0, %c0_i32 : i32, i32
  }
  func.func @transform_1(%arg0: i32) -> (i32, i32) {
    %c0_i32 = arith.constant 0 : i32
    %c0_i32_0 = arith.constant 0 : i32
    %c0_i32_1 = arith.constant 0 : i32
    return %c0_i32, %c0_i32_0 : i32, i32
  }
  func.func @transform_2(%arg0: i32) -> (i32, i32) {
    %c0_i32 = arith.constant 0 : i32
    %c0_i32_0 = arith.constant 0 : i32
    %c0_i32_1 = arith.constant 0 : i32
    return %c0_i32, %c0_i32_0 : i32, i32
  }
  func.func @transform_3(%arg0: i32) -> (i32, i32) {
    %c0_i32 = arith.constant 0 : i32
    %c0_i32_0 = arith.constant 0 : i32
    return %arg0, %c0_i32 : i32, i32
  }
}

</mosaic_0001>

<llo_original>
// kernel: _lambda_.1
$region0: #{_lambda_.1}
  #allocation0 [shape = 'u32[]', space=smem, size = 0x4, offset = 0x4, fixed_abs, tag = 'smem constant byte address 0x4 - core index']
  #allocation1 [shape = 'u32[144,128]{1,0:T(1,128)}', space=vmem, size = 0x12000, scoped, tag = 'internal scratch']
  %s0 = inlined_call_operand.vmem [shape: f32[8,128], index: 0, kind: input, shape index: {}]
  %s1 = inlined_call_operand.vmem [shape: f32[128,4], index: 1, kind: input, shape index: {}]
  %s2 = inlined_call_operand.vmem [shape: f32[1,4], index: 2, kind: input, shape index: {}]
  %s3 = inlined_call_operand.vmem [shape: f32[8,4], index: 3, kind: output, shape index: {}]
  %s4 = sld [smem:[#allocation0]]
  $region22: #{_lambda_.1} parent=0
    _
  %s6 = ssub.s32 1, %s4
  %s7 = scalar_select 0, %s6, %s4
  // Predicated region
  $region2: #{_lambda_.1} parent=0 // pred_check
    _
  $region3: #{_lambda_.1} parent=0 // pred_check_branch
    %9 = sbr.rel (0) target = $region5
  $region4: #{_lambda_.1} parent=0 // pred_region
    _
  $region5: #{_lambda_.1} parent=0 // pred_fallthru
    _
  // Predicated region
  $region6: #{_lambda_.1} parent=0 // pred_check
    _
  $region7: #{_lambda_.1} parent=0 // pred_check_branch
    %11 = sbr.rel (0) target = $region9
  $region8: #{_lambda_.1} parent=0 // pred_region
    _
  $region9: #{_lambda_.1} parent=0 // pred_fallthru
    _
  // Predicated region
  $region10: #{_lambda_.1} parent=0 // pred_check
    _
  $region11: #{_lambda_.1} parent=0 // pred_check_branch
    %13 = sbr.rel (0) target = $region13
  $region12: #{_lambda_.1} parent=0 // pred_region
    _
  $region13: #{_lambda_.1} parent=0 // pred_fallthru
    _
  %v14 = vld [vmem:[%s0] sm:$0xff]
  %v15 = vld [vmem:[%s1] sm:$0xff]
  %v16 = vld [vmem:[%s1 + $0x8] sm:$0xff]
  %v17 = vld [vmem:[%s1 + $0x10] sm:$0xff]
  %v18 = vld [vmem:[%s1 + $0x18] sm:$0xff]
  %v19 = vld [vmem:[%s1 + $0x20] sm:$0xff]
  %v20 = vld [vmem:[%s1 + $0x28] sm:$0xff]
  %v21 = vld [vmem:[%s1 + $0x30] sm:$0xff]
  %v22 = vld [vmem:[%s1 + $0x38] sm:$0xff]
  %v23 = vld [vmem:[%s1 + $0x40] sm:$0xff]
  %v24 = vld [vmem:[%s1 + $0x48] sm:$0xff]
  %v25 = vld [vmem:[%s1 + $0x50] sm:$0xff]
  %v26 = vld [vmem:[%s1 + $0x58] sm:$0xff]
  %v27 = vld [vmem:[%s1 + $0x60] sm:$0xff]
  %v28 = vld [vmem:[%s1 + $0x68] sm:$0xff]
  %v29 = vld [vmem:[%s1 + $0x70] sm:$0xff]
  %v30 = vld [vmem:[%s1 + $0x78] sm:$0xff]
  %v31 = vld [vmem:[%s2] sm:$0x1]
  %v33 = vlaneseq
  %v34 = vshrl.u32 %v33, 7
  %v35 = vsub.s32 0, %v34
  %v36 = vrot.slane %v31, %v35
  %38 = vmatprep.subr.mxu0 0.0
  %39 = vmatpush1.msra.mxu0 %v15
  %40 = vmatprep.subr.mxu0 0.0
  %41 = vmatpush1.msra.mxu0 %v16
  %42 = vmatprep.subr.mxu0 0.0
  %43 = vmatpush1.msra.mxu0 %v17
  %44 = vmatprep.subr.mxu0 0.0
  %45 = vmatpush1.msra.mxu0 %v18
  %46 = vmatprep.subr.mxu0 0.0
  %47 = vmatpush1.msra.mxu0 %v19
  %48 = vmatprep.subr.mxu0 0.0
  %49 = vmatpush1.msra.mxu0 %v20
  %50 = vmatprep.subr.mxu0 0.0
  %51 = vmatpush1.msra.mxu0 %v21
  %52 = vmatprep.subr.mxu0 0.0
  %53 = vmatpush1.msra.mxu0 %v22
  %54 = vmatprep.subr.mxu0 0.0
  %55 = vmatpush1.msra.mxu0 %v23
  %56 = vmatprep.subr.mxu0 0.0
  %57 = vmatpush1.msra.mxu0 %v24
  %58 = vmatprep.subr.mxu0 0.0
  %59 = vmatpush1.msra.mxu0 %v25
  %60 = vmatprep.subr.mxu0 0.0
  %61 = vmatpush1.msra.mxu0 %v26
  %62 = vmatprep.subr.mxu0 0.0
  %63 = vmatpush1.msra.mxu0 %v27
  %64 = vmatprep.subr.mxu0 0.0
  %65 = vmatpush1.msra.mxu0 %v28
  %66 = vmatprep.subr.mxu0 0.0
  %67 = vmatpush1.msra.mxu0 %v29
  %68 = vmatprep.subr.mxu0 0.0
  %69 = vmatpush1.msra.mxu0 %v30
  %70 = vmatprep.subr.mxu0 0.0
  %71 = vmatpush1.msra.mxu0 0.0
  %72 = vmatprep.subr.mxu0 0.0
  %73 = vmatpush1.msra.mxu0 0.0
  %74 = vmatprep.subr.mxu0 0.0
  %75 = vmatpush1.msra.mxu0 0.0
  %76 = vmatprep.subr.mxu0 0.0
  %77 = vmatpush1.msra.mxu0 0.0
  %78 = vmatprep.subr.mxu0 0.0
  %79 = vmatpush1.msra.mxu0 0.0
  %80 = vmatprep.subr.mxu0 0.0
  %81 = vmatpush1.msra.mxu0 0.0
  %82 = vmatprep.subr.mxu0 0.0
  %83 = vmatpush1.msra.mxu0 0.0
  %84 = vmatprep.subr.mxu0 0.0
  %85 = vmatpush1.msra.mxu0 0.0
  %86 = vmatprep.subr.mxu0 0.0
  %87 = vmatpush1.msra.mxu0 0.0
  %88 = vmatprep.subr.mxu0 0.0
  %89 = vmatpush1.msra.mxu0 0.0
  %90 = vmatprep.subr.mxu0 0.0
  %91 = vmatpush1.msra.mxu0 0.0
  %92 = vmatprep.subr.mxu0 0.0
  %93 = vmatpush1.msra.mxu0 0.0
  %94 = vmatprep.subr.mxu0 0.0
  %95 = vmatpush1.msra.mxu0 0.0
  %96 = vmatprep.subr.mxu0 0.0
  %97 = vmatpush1.msra.mxu0 0.0
  %98 = vmatprep.subr.mxu0 0.0
  %99 = vmatpush1.msra.mxu0 0.0
  %100 = vmatprep.subr.mxu0 0.0
  %101 = vmatpush1.msra.mxu0 0.0
  %102 = vmatprep.mubr.f32.mxu0 0.0
  %103 = vmatmul.mubr.f32.gmra.mrb[0].mxu0 %v14
  %v104 = vpop.f32.mrb[0].mxu0
  %v105 = vadd.f32 %v36, %v104
  %v106 = vpop.f32.mrb[0].mxu0
  %107 = vdwg.mxu0
  %v108 = vtanh.pop %v105
  %vm109 = vcmask 31744
  %110 = vst.msk [vmem:[%s3] sm:$0xff] %vm109, %v108
  // Predicated region
  $region14: #{_lambda_.1} parent=0 // pred_check
    _
  $region15: #{_lambda_.1} parent=0 // pred_check_branch
    %112 = sbr.rel (0) target = $region17
  $region16: #{_lambda_.1} parent=0 // pred_region
    _
  $region17: #{_lambda_.1} parent=0 // pred_fallthru
    _
  // Predicated region
  $region18: #{_lambda_.1} parent=0 // pred_check
    _
  $region19: #{_lambda_.1} parent=0 // pred_check_branch
    %114 = sbr.rel (0) target = $region21
  $region20: #{_lambda_.1} parent=0 // pred_region
    _
  $region21: #{_lambda_.1} parent=0 // pred_fallthru
    _

</llo_original>
